<compile_context>
chip_gen: v5e
topology: v5e:2x2
jax: 0.10.0
libtpu: 0.0.40
codegen_flags: <defaults>
</compile_context>

<pallas_src>
import jax
import jax.numpy as jnp
from jax import lax
from jax.experimental import pallas as pl
from jax.experimental.pallas import tpu as pltpu


def _round_up(x: int, m: int) -> int:
    return ((x + m - 1) // m) * m


def _make_kernel(rc: int, n_chunks: int, invert: bool, tl: int):
    """Build the kernel with rank-chunk size / #chunks / inversion baked in."""

    def scatter_chunk(ord_ref, tb):
        # Token index of every output lane of this (TB, TL) block.
        l0 = pl.program_id(1) * tl
        j = lax.broadcasted_iota(jnp.int32, (tb, tl), 1) + l0      # hoisted
        acc = jnp.zeros((tb, tl), jnp.bool_)
        for r in range(rc):                                        # rc <= 128
            # (TB, 1) order column, lane-broadcast compare, OR into bool acc.
            acc = acc | (ord_ref[:, r:r + 1] == j)
        return acc

    if n_chunks == 1:
        def kernel(ord_ref, mask_ref):
            tb = mask_ref.shape[0]
            acc = scatter_chunk(ord_ref, tb)
            if invert:
                mask_ref[...] = (~acc).astype(mask_ref.dtype)
            else:
                mask_ref[...] = acc.astype(mask_ref.dtype)
        return kernel

    def kernel(ord_ref, mask_ref):
        c = pl.program_id(2)
        tb = mask_ref.shape[0]
        chunk = scatter_chunk(ord_ref, tb).astype(mask_ref.dtype)

        @pl.when(c == 0)
        def _():
            mask_ref[...] = chunk

        @pl.when(c != 0)
        def _():
            mask_ref[...] = jnp.maximum(mask_ref[...], chunk)

        if invert:
            @pl.when(c == n_chunks - 1)
            def _():
                mask_ref[...] = 1.0 - mask_ref[...]

    return kernel


def mask_generator_forward(patches: jax.Array, orders: jax.Array,
                           mask_ratio: float = 0.75) -> jax.Array:
    """Pallas implementation of MaskGenerator.forward.

    patches: (B, L, D) float  -- only its (B, L) shape is used.
    orders:  (B, L)   int     -- per-sample permutation of token indices.
    returns: (B, L)   float32 -- 1.0 for masked tokens, 0.0 for kept tokens.
    """
    B, L, _ = patches.shape
    num_mask = max(0, min(L, int(round(mask_ratio * L))))   # static Python int

    if num_mask == 0:
        return jnp.zeros((B, L), jnp.float32)
    if num_mask == L:
        return jnp.ones((B, L), jnp.float32)

    orders_2d = orders.astype(jnp.int32).reshape(B, L)

    # --- complement trick: visit min(num_mask, L - num_mask) ranks ----------
    invert = num_mask > L - num_mask
    visited = orders_2d[:, num_mask:] if invert else orders_2d[:, :num_mask]
    nv = visited.shape[1]

    # --- rank chunking (extra grid axis only if > 128 ranks are visited) ----
    if nv <= 128:
        rc, n_chunks = nv, 1
    else:
        rc = 128
        nv_pad = _round_up(nv, rc)
        n_chunks = nv_pad // rc
        if nv_pad != nv:   # -1 sentinel never matches a token index
            visited = jnp.pad(visited, ((0, 0), (0, nv_pad - nv)),
                              constant_values=-1)

    # --- batch tiling --------------------------------------------------------
    if B <= 8:
        tb = B                                   # block dim == full batch dim
    else:
        tb = 8
        # grow TB to amortize per-step overhead while keeping TB*128 <= 8192
        while tb < 32 and tb * 2 <= B and (tb * 2) * min(L, 128) <= 8192:
            tb *= 2
    b_pad = _round_up(B, tb)
    if b_pad != B:
        visited = jnp.pad(visited, ((0, b_pad - B), (0, 0)))

    # --- token tiling: register-resident (TB, TL) accumulator ---------------
    budget_tl = max(128, (8192 // tb) // 128 * 128)
    if L % 128 != 0 or L <= budget_tl:
        tl = L
    else:
        tl = 128
        t = 256
        while t <= budget_tl:            # largest 128-multiple divisor of L
            if L % t == 0:
                tl = t
            t += 128

    n_b, n_l = b_pad // tb, L // tl
    if n_chunks == 1:
        grid = (n_b, n_l)
        in_specs = [pl.BlockSpec((tb, rc), lambda b, l: (b, 0))]
        out_specs = pl.BlockSpec((tb, tl), lambda b, l: (b, l))
        sem = ("parallel", "parallel")
    else:
        grid = (n_b, n_l, n_chunks)
        in_specs = [pl.BlockSpec((tb, rc), lambda b, l, c: (b, c))]
        out_specs = pl.BlockSpec((tb, tl), lambda b, l, c: (b, l))
        sem = ("parallel", "parallel", "arbitrary")

    mask = pl.pallas_call(
        _make_kernel(rc, n_chunks, invert, tl),
        out_shape=jax.ShapeDtypeStruct((b_pad, L), jnp.float32),
        grid_spec=pltpu.PrefetchScalarGridSpec(
            num_scalar_prefetch=0, grid=grid,
            in_specs=in_specs, out_specs=out_specs),
        compiler_params=pltpu.CompilerParams(dimension_semantics=sem),
    )(visited)

    return mask[:B]


def _mask_reference(B, L, orders, num_mask):
    ref = jnp.zeros((B, L), jnp.float32)
    batch_idx = jnp.arange(B)[:, None]
    return ref.at[batch_idx, orders[:, :num_mask]].set(1.0)


if __name__ == "__main__":
    key = jax.random.PRNGKey(0)

    def run_case(B, L, D, mask_ratio, case_key):
        k_patch, k_perm = jax.random.split(case_key)
        patches = jax.random.normal(k_patch, (B, L, D), dtype=jnp.float32)
        perm_keys = jax.random.split(k_perm, B)
        orders = jnp.stack(
            [jax.random.permutation(k, L) for k in perm_keys]).astype(jnp.int32)

        mask = jax.block_until_ready(
            mask_generator_forward(patches, orders, mask_ratio))

        num_mask = max(0, min(L, int(round(mask_ratio * L))))
        ref = _mask_reference(B, L, orders, num_mask)
        assert mask.shape == (B, L) and mask.dtype == jnp.float32
        assert jnp.array_equal(mask, ref), "Pallas mask does not match reference"
        assert jnp.all(jnp.sum(mask, axis=-1) == num_mask)

    k0, k1 = jax.random.split(key)
    # Primary (module-typical small shape): complement / inverted scatter path.
    run_case(B=2, L=128, D=32, mask_ratio=0.75, case_key=k0)
    # Secondary: non-inverted path with a multi-chunk rank axis.
    run_case(B=4, L=512, D=8, mask_ratio=0.5, case_key=k1)

    print("KERNEL_OK")
</pallas_src>

<mosaic_0001>
module attributes {stable_mosaic.version = 11 : i64} {
  func.func @kernel(%arg0: i32, %arg1: i32, %arg2: memref<2x32xi32, #tpu.memory_space<vmem>>, %arg3: memref<2x128xf32, #tpu.memory_space<vmem>>) attributes {dimension_semantics = [#tpu.dimension_semantics<parallel>, #tpu.dimension_semantics<parallel>], iteration_bounds = array<i64: 1, 1>, scalar_prefetch = 0 : i64, scratch_operands = 0 : i64, tpu.core_type = #tpu.core_type<tc>, window_params = [{transform_indices = @transform_0, window_bounds = array<i64: 2, 32>}, {transform_indices = @transform_1, window_bounds = array<i64: 2, 128>}]} {
    %c128_i32 = arith.constant 128 : i32
    %0 = arith.muli %arg1, %c128_i32 : i32
    %1 = tpu.iota {dimensions = array<i32: 1>} : vector<2x128xi32>
    %2 = vector.broadcast %0 : i32 to vector<2x128xi32>
    %3 = arith.addi %1, %2 : vector<2x128xi32>
    %false = arith.constant false
    %4 = vector.broadcast %false : i1 to vector<2x128xi1>
    %c0 = arith.constant 0 : index
    %c0_0 = arith.constant 0 : index
    %5 = vector.load %arg2[%c0, %c0_0] : memref<2x32xi32, #tpu.memory_space<vmem>>, vector<2x1xi32>
    %6 = vector.broadcast %5 : vector<2x1xi32> to vector<2x128xi32>
    %7 = arith.cmpi eq, %6, %3 : vector<2x128xi32>
    %8 = arith.ori %4, %7 : vector<2x128xi1>
    %c0_1 = arith.constant 0 : index
    %c1 = arith.constant 1 : index
    %9 = vector.load %arg2[%c0_1, %c1] : memref<2x32xi32, #tpu.memory_space<vmem>>, vector<2x1xi32>
    %10 = vector.broadcast %9 : vector<2x1xi32> to vector<2x128xi32>
    %11 = arith.cmpi eq, %10, %3 : vector<2x128xi32>
    %12 = arith.ori %8, %11 : vector<2x128xi1>
    %c0_2 = arith.constant 0 : index
    %c2 = arith.constant 2 : index
    %13 = vector.load %arg2[%c0_2, %c2] : memref<2x32xi32, #tpu.memory_space<vmem>>, vector<2x1xi32>
    %14 = vector.broadcast %13 : vector<2x1xi32> to vector<2x128xi32>
    %15 = arith.cmpi eq, %14, %3 : vector<2x128xi32>
    %16 = arith.ori %12, %15 : vector<2x128xi1>
    %c0_3 = arith.constant 0 : index
    %c3 = arith.constant 3 : index
    %17 = vector.load %arg2[%c0_3, %c3] : memref<2x32xi32, #tpu.memory_space<vmem>>, vector<2x1xi32>
    %18 = vector.broadcast %17 : vector<2x1xi32> to vector<2x128xi32>
    %19 = arith.cmpi eq, %18, %3 : vector<2x128xi32>
    %20 = arith.ori %16, %19 : vector<2x128xi1>
    %c0_4 = arith.constant 0 : index
    %c4 = arith.constant 4 : index
    %21 = vector.load %arg2[%c0_4, %c4] : memref<2x32xi32, #tpu.memory_space<vmem>>, vector<2x1xi32>
    %22 = vector.broadcast %21 : vector<2x1xi32> to vector<2x128xi32>
    %23 = arith.cmpi eq, %22, %3 : vector<2x128xi32>
    %24 = arith.ori %20, %23 : vector<2x128xi1>
    %c0_5 = arith.constant 0 : index
    %c5 = arith.constant 5 : index
    %25 = vector.load %arg2[%c0_5, %c5] : memref<2x32xi32, #tpu.memory_space<vmem>>, vector<2x1xi32>
    %26 = vector.broadcast %25 : vector<2x1xi32> to vector<2x128xi32>
    %27 = arith.cmpi eq, %26, %3 : vector<2x128xi32>
    %28 = arith.ori %24, %27 : vector<2x128xi1>
    %c0_6 = arith.constant 0 : index
    %c6 = arith.constant 6 : index
    %29 = vector.load %arg2[%c0_6, %c6] : memref<2x32xi32, #tpu.memory_space<vmem>>, vector<2x1xi32>
    %30 = vector.broadcast %29 : vector<2x1xi32> to vector<2x128xi32>
    %31 = arith.cmpi eq, %30, %3 : vector<2x128xi32>
    %32 = arith.ori %28, %31 : vector<2x128xi1>
    %c0_7 = arith.constant 0 : index
    %c7 = arith.constant 7 : index
    %33 = vector.load %arg2[%c0_7, %c7] : memref<2x32xi32, #tpu.memory_space<vmem>>, vector<2x1xi32>
    %34 = vector.broadcast %33 : vector<2x1xi32> to vector<2x128xi32>
    %35 = arith.cmpi eq, %34, %3 : vector<2x128xi32>
    %36 = arith.ori %32, %35 : vector<2x128xi1>
    %c0_8 = arith.constant 0 : index
    %c8 = arith.constant 8 : index
    %37 = vector.load %arg2[%c0_8, %c8] : memref<2x32xi32, #tpu.memory_space<vmem>>, vector<2x1xi32>
    %38 = vector.broadcast %37 : vector<2x1xi32> to vector<2x128xi32>
    %39 = arith.cmpi eq, %38, %3 : vector<2x128xi32>
    %40 = arith.ori %36, %39 : vector<2x128xi1>
    %c0_9 = arith.constant 0 : index
    %c9 = arith.constant 9 : index
    %41 = vector.load %arg2[%c0_9, %c9] : memref<2x32xi32, #tpu.memory_space<vmem>>, vector<2x1xi32>
    %42 = vector.broadcast %41 : vector<2x1xi32> to vector<2x128xi32>
    %43 = arith.cmpi eq, %42, %3 : vector<2x128xi32>
    %44 = arith.ori %40, %43 : vector<2x128xi1>
    %c0_10 = arith.constant 0 : index
    %c10 = arith.constant 10 : index
    %45 = vector.load %arg2[%c0_10, %c10] : memref<2x32xi32, #tpu.memory_space<vmem>>, vector<2x1xi32>
    %46 = vector.broadcast %45 : vector<2x1xi32> to vector<2x128xi32>
    %47 = arith.cmpi eq, %46, %3 : vector<2x128xi32>
    %48 = arith.ori %44, %47 : vector<2x128xi1>
    %c0_11 = arith.constant 0 : index
    %c11 = arith.constant 11 : index
    %49 = vector.load %arg2[%c0_11, %c11] : memref<2x32xi32, #tpu.memory_space<vmem>>, vector<2x1xi32>
    %50 = vector.broadcast %49 : vector<2x1xi32> to vector<2x128xi32>
    %51 = arith.cmpi eq, %50, %3 : vector<2x128xi32>
    %52 = arith.ori %48, %51 : vector<2x128xi1>
    %c0_12 = arith.constant 0 : index
    %c12 = arith.constant 12 : index
    %53 = vector.load %arg2[%c0_12, %c12] : memref<2x32xi32, #tpu.memory_space<vmem>>, vector<2x1xi32>
    %54 = vector.broadcast %53 : vector<2x1xi32> to vector<2x128xi32>
    %55 = arith.cmpi eq, %54, %3 : vector<2x128xi32>
    %56 = arith.ori %52, %55 : vector<2x128xi1>
    %c0_13 = arith.constant 0 : index
    %c13 = arith.constant 13 : index
    %57 = vector.load %arg2[%c0_13, %c13] : memref<2x32xi32, #tpu.memory_space<vmem>>, vector<2x1xi32>
    %58 = vector.broadcast %57 : vector<2x1xi32> to vector<2x128xi32>
    %59 = arith.cmpi eq, %58, %3 : vector<2x128xi32>
    %60 = arith.ori %56, %59 : vector<2x128xi1>
    %c0_14 = arith.constant 0 : index
    %c14 = arith.constant 14 : index
    %61 = vector.load %arg2[%c0_14, %c14] : memref<2x32xi32, #tpu.memory_space<vmem>>, vector<2x1xi32>
    %62 = vector.broadcast %61 : vector<2x1xi32> to vector<2x128xi32>
    %63 = arith.cmpi eq, %62, %3 : vector<2x128xi32>
    %64 = arith.ori %60, %63 : vector<2x128xi1>
    %c0_15 = arith.constant 0 : index
    %c15 = arith.constant 15 : index
    %65 = vector.load %arg2[%c0_15, %c15] : memref<2x32xi32, #tpu.memory_space<vmem>>, vector<2x1xi32>
    %66 = vector.broadcast %65 : vector<2x1xi32> to vector<2x128xi32>
    %67 = arith.cmpi eq, %66, %3 : vector<2x128xi32>
    %68 = arith.ori %64, %67 : vector<2x128xi1>
    %c0_16 = arith.constant 0 : index
    %c16 = arith.constant 16 : index
    %69 = vector.load %arg2[%c0_16, %c16] : memref<2x32xi32, #tpu.memory_space<vmem>>, vector<2x1xi32>
    %70 = vector.broadcast %69 : vector<2x1xi32> to vector<2x128xi32>
    %71 = arith.cmpi eq, %70, %3 : vector<2x128xi32>
    %72 = arith.ori %68, %71 : vector<2x128xi1>
    %c0_17 = arith.constant 0 : index
    %c17 = arith.constant 17 : index
    %73 = vector.load %arg2[%c0_17, %c17] : memref<2x32xi32, #tpu.memory_space<vmem>>, vector<2x1xi32>
    %74 = vector.broadcast %73 : vector<2x1xi32> to vector<2x128xi32>
    %75 = arith.cmpi eq, %74, %3 : vector<2x128xi32>
    %76 = arith.ori %72, %75 : vector<2x128xi1>
    %c0_18 = arith.constant 0 : index
    %c18 = arith.constant 18 : index
    %77 = vector.load %arg2[%c0_18, %c18] : memref<2x32xi32, #tpu.memory_space<vmem>>, vector<2x1xi32>
    %78 = vector.broadcast %77 : vector<2x1xi32> to vector<2x128xi32>
    %79 = arith.cmpi eq, %78, %3 : vector<2x128xi32>
    %80 = arith.ori %76, %79 : vector<2x128xi1>
    %c0_19 = arith.constant 0 : index
    %c19 = arith.constant 19 : index
    %81 = vector.load %arg2[%c0_19, %c19] : memref<2x32xi32, #tpu.memory_space<vmem>>, vector<2x1xi32>
    %82 = vector.broadcast %81 : vector<2x1xi32> to vector<2x128xi32>
    %83 = arith.cmpi eq, %82, %3 : vector<2x128xi32>
    %84 = arith.ori %80, %83 : vector<2x128xi1>
    %c0_20 = arith.constant 0 : index
    %c20 = arith.constant 20 : index
    %85 = vector.load %arg2[%c0_20, %c20] : memref<2x32xi32, #tpu.memory_space<vmem>>, vector<2x1xi32>
    %86 = vector.broadcast %85 : vector<2x1xi32> to vector<2x128xi32>
    %87 = arith.cmpi eq, %86, %3 : vector<2x128xi32>
    %88 = arith.ori %84, %87 : vector<2x128xi1>
    %c0_21 = arith.constant 0 : index
    %c21 = arith.constant 21 : index
    %89 = vector.load %arg2[%c0_21, %c21] : memref<2x32xi32, #tpu.memory_space<vmem>>, vector<2x1xi32>
    %90 = vector.broadcast %89 : vector<2x1xi32> to vector<2x128xi32>
    %91 = arith.cmpi eq, %90, %3 : vector<2x128xi32>
    %92 = arith.ori %88, %91 : vector<2x128xi1>
    %c0_22 = arith.constant 0 : index
    %c22 = arith.constant 22 : index
    %93 = vector.load %arg2[%c0_22, %c22] : memref<2x32xi32, #tpu.memory_space<vmem>>, vector<2x1xi32>
    %94 = vector.broadcast %93 : vector<2x1xi32> to vector<2x128xi32>
    %95 = arith.cmpi eq, %94, %3 : vector<2x128xi32>
    %96 = arith.ori %92, %95 : vector<2x128xi1>
    %c0_23 = arith.constant 0 : index
    %c23 = arith.constant 23 : index
    %97 = vector.load %arg2[%c0_23, %c23] : memref<2x32xi32, #tpu.memory_space<vmem>>, vector<2x1xi32>
    %98 = vector.broadcast %97 : vector<2x1xi32> to vector<2x128xi32>
    %99 = arith.cmpi eq, %98, %3 : vector<2x128xi32>
    %100 = arith.ori %96, %99 : vector<2x128xi1>
    %c0_24 = arith.constant 0 : index
    %c24 = arith.constant 24 : index
    %101 = vector.load %arg2[%c0_24, %c24] : memref<2x32xi32, #tpu.memory_space<vmem>>, vector<2x1xi32>
    %102 = vector.broadcast %101 : vector<2x1xi32> to vector<2x128xi32>
    %103 = arith.cmpi eq, %102, %3 : vector<2x128xi32>
    %104 = arith.ori %100, %103 : vector<2x128xi1>
    %c0_25 = arith.constant 0 : index
    %c25 = arith.constant 25 : index
    %105 = vector.load %arg2[%c0_25, %c25] : memref<2x32xi32, #tpu.memory_space<vmem>>, vector<2x1xi32>
    %106 = vector.broadcast %105 : vector<2x1xi32> to vector<2x128xi32>
    %107 = arith.cmpi eq, %106, %3 : vector<2x128xi32>
    %108 = arith.ori %104, %107 : vector<2x128xi1>
    %c0_26 = arith.constant 0 : index
    %c26 = arith.constant 26 : index
    %109 = vector.load %arg2[%c0_26, %c26] : memref<2x32xi32, #tpu.memory_space<vmem>>, vector<2x1xi32>
    %110 = vector.broadcast %109 : vector<2x1xi32> to vector<2x128xi32>
    %111 = arith.cmpi eq, %110, %3 : vector<2x128xi32>
    %112 = arith.ori %108, %111 : vector<2x128xi1>
    %c0_27 = arith.constant 0 : index
    %c27 = arith.constant 27 : index
    %113 = vector.load %arg2[%c0_27, %c27] : memref<2x32xi32, #tpu.memory_space<vmem>>, vector<2x1xi32>
    %114 = vector.broadcast %113 : vector<2x1xi32> to vector<2x128xi32>
    %115 = arith.cmpi eq, %114, %3 : vector<2x128xi32>
    %116 = arith.ori %112, %115 : vector<2x128xi1>
    %c0_28 = arith.constant 0 : index
    %c28 = arith.constant 28 : index
    %117 = vector.load %arg2[%c0_28, %c28] : memref<2x32xi32, #tpu.memory_space<vmem>>, vector<2x1xi32>
    %118 = vector.broadcast %117 : vector<2x1xi32> to vector<2x128xi32>
    %119 = arith.cmpi eq, %118, %3 : vector<2x128xi32>
    %120 = arith.ori %116, %119 : vector<2x128xi1>
    %c0_29 = arith.constant 0 : index
    %c29 = arith.constant 29 : index
    %121 = vector.load %arg2[%c0_29, %c29] : memref<2x32xi32, #tpu.memory_space<vmem>>, vector<2x1xi32>
    %122 = vector.broadcast %121 : vector<2x1xi32> to vector<2x128xi32>
    %123 = arith.cmpi eq, %122, %3 : vector<2x128xi32>
    %124 = arith.ori %120, %123 : vector<2x128xi1>
    %c0_30 = arith.constant 0 : index
    %c30 = arith.constant 30 : index
    %125 = vector.load %arg2[%c0_30, %c30] : memref<2x32xi32, #tpu.memory_space<vmem>>, vector<2x1xi32>
    %126 = vector.broadcast %125 : vector<2x1xi32> to vector<2x128xi32>
    %127 = arith.cmpi eq, %126, %3 : vector<2x128xi32>
    %128 = arith.ori %124, %127 : vector<2x128xi1>
    %c0_31 = arith.constant 0 : index
    %c31 = arith.constant 31 : index
    %129 = vector.load %arg2[%c0_31, %c31] : memref<2x32xi32, #tpu.memory_space<vmem>>, vector<2x1xi32>
    %130 = vector.broadcast %129 : vector<2x1xi32> to vector<2x128xi32>
    %131 = arith.cmpi eq, %130, %3 : vector<2x128xi32>
    %132 = arith.ori %128, %131 : vector<2x128xi1>
    %cst = arith.constant dense<true> : vector<2x128xi1>
    %133 = arith.xori %132, %cst : vector<2x128xi1>
    %134 = arith.extui %133 : vector<2x128xi1> to vector<2x128xi32>
    %135 = arith.sitofp %134 : vector<2x128xi32> to vector<2x128xf32>
    %c0_32 = arith.constant 0 : index
    %c0_33 = arith.constant 0 : index
    %136 = vector.load %arg3[%c0_32, %c0_33] : memref<2x128xf32, #tpu.memory_space<vmem>>, vector<2x128xf32>
    tpu.vector_store %arg3[%c0_32, %c0_33], %135 {strides = array<i32>} : memref<2x128xf32, #tpu.memory_space<vmem>>, vector<2x128xf32>,
    return
  }
  func.func @transform_0(%arg0: i32, %arg1: i32) -> (i32, i32) {
    %c0_i32 = arith.constant 0 : i32
    %c0_i32_0 = arith.constant 0 : i32
    return %arg0, %c0_i32 : i32, i32
  }
  func.func @transform_1(%arg0: i32, %arg1: i32) -> (i32, i32) {
    %c0_i32 = arith.constant 0 : i32
    return %arg0, %arg1 : i32, i32
  }
}

</mosaic_0001>

<llo_original>
// kernel: tpu_custom_call.1
$region0: #{tpu_custom_call.1}
  #allocation0 [shape = 'u32[]', space=smem, size = 0x4, offset = 0x4, fixed_abs, tag = 'smem constant byte address 0x4 - core index']
  #allocation1 [shape = 'u32[72,128]{1,0:T(1,128)}', space=vmem, size = 0x9000, scoped, tag = 'internal scratch']
  %s0 = inlined_call_operand.hbm [shape: s32[2,32], index: 0, kind: input, shape index: {}]
  %s1 = inlined_call_operand.hbm [shape: f32[2,128], index: 1, kind: output, shape index: {}]
  %s2 = sld [smem:[#allocation0]]
  $region18: #{tpu_custom_call.1} parent=0
    _
  %s4 = ssub.s32 1, %s2
  %s5 = scalar_select 0, %s4, %s2
  $region1: #{tpu_custom_call.1} parent=0
    #allocation2 [shape = 'u8[1024]{0}', space=vmem, size = 0x400, scoped, tag = 'input window, operand 0, single buffered']
    #allocation3 [shape = 's32[1]{0}', space=sflag, size = 0x4, scoped, tag = 'scoped memory for tpu_custom_call.1']
    #allocation4 [shape = 's32[1]{0}', space=sflag, size = 0x4, scoped, tag = 'scoped memory for tpu_custom_call.1']
    #allocation5 [shape = 'u8[1024]{0}', space=vmem, size = 0x400, scoped, tag = 'output window, operand 0, single buffered']
    %6 = vsyncpa [#allocation3], 0
    %7 = vsyncpa [#allocation4], 0
    // Predicated region
    $region2: #{tpu_custom_call.1} parent=1 // pred_check
      _
    $region3: #{tpu_custom_call.1} parent=1 // pred_check_branch
      %9 = sbr.rel (0) target = $region5
    $region4: #{tpu_custom_call.1} parent=1 // pred_region
      %11 = vsyncadd [#allocation3], 0
      %s13 = sshll.u32 %s0, 4
      %s14 = int_to_ptr.hbm [resolvable:$true] %s13
      %s15 = sshll.u32 [#allocation2], 4
      %s16 = int_to_ptr.vmem [resolvable:$true] %s15
      %18 = dma.hbm_to_vmem [thread:$0]  %s14, 32, %s16, [#allocation3]
    $region5: #{tpu_custom_call.1} parent=1 // pred_fallthru
      _
    // Predicated region
    $region6: #{tpu_custom_call.1} parent=1 // pred_check
      _
    $region7: #{tpu_custom_call.1} parent=1 // pred_check_branch
      %20 = sbr.rel (0) target = $region9
    $region8: #{tpu_custom_call.1} parent=1 // pred_region
      %22 = dma.done [#allocation3], 32
    $region9: #{tpu_custom_call.1} parent=1 // pred_fallthru
      _
    %s23 = smul.u32 0, 128
    %v24 = vlaneseq
    %v25 = vand.u32 %v24, 127
    %v26 = vstv %s23
    %v27 = vadd.s32 %v25, %v26
    %v28 = vld [vmem:[#allocation2] sm:$0x3]
    %29 = vset.pattern.permute.xlu0 0
    %30 = vperm.xlu0 %29, %v28
    %v31 = vpop.permute.xlu0 %30
    %vm32 = vcmp.eq.s32.totalorder %v31, %v27
    %33 = vset.pattern.permute.xlu0 1
    %34 = vperm.xlu0 %33, %v28
    %v35 = vpop.permute.xlu0 %34
    %vm36 = vcmp.eq.s32.totalorder %v35, %v27
    %vm37 = vmor %vm32, %vm36
    %38 = vset.pattern.permute.xlu0 2
    %39 = vperm.xlu0 %38, %v28
    %v40 = vpop.permute.xlu0 %39
    %vm41 = vcmp.eq.s32.totalorder %v40, %v27
    %vm42 = vmor %vm37, %vm41
    %43 = vset.pattern.permute.xlu0 3
    %44 = vperm.xlu0 %43, %v28
    %v45 = vpop.permute.xlu0 %44
    %vm46 = vcmp.eq.s32.totalorder %v45, %v27
    %vm47 = vmor %vm42, %vm46
    %48 = vset.pattern.permute.xlu0 4
    %49 = vperm.xlu0 %48, %v28
    %v50 = vpop.permute.xlu0 %49
    %vm51 = vcmp.eq.s32.totalorder %v50, %v27
    %vm52 = vmor %vm47, %vm51
    %53 = vset.pattern.permute.xlu0 5
    %54 = vperm.xlu0 %53, %v28
    %v55 = vpop.permute.xlu0 %54
    %vm56 = vcmp.eq.s32.totalorder %v55, %v27
    %vm57 = vmor %vm52, %vm56
    %58 = vset.pattern.permute.xlu0 6
    %59 = vperm.xlu0 %58, %v28
    %v60 = vpop.permute.xlu0 %59
    %vm61 = vcmp.eq.s32.totalorder %v60, %v27
    %vm62 = vmor %vm57, %vm61
    %63 = vset.pattern.permute.xlu0 7
    %64 = vperm.xlu0 %63, %v28
    %v65 = vpop.permute.xlu0 %64
    %vm66 = vcmp.eq.s32.totalorder %v65, %v27
    %vm67 = vmor %vm62, %vm66
    %68 = vset.pattern.permute.xlu0 8
    %69 = vperm.xlu0 %68, %v28
    %v70 = vpop.permute.xlu0 %69
    %vm71 = vcmp.eq.s32.totalorder %v70, %v27
    %vm72 = vmor %vm67, %vm71
    %73 = vset.pattern.permute.xlu0 9
    %74 = vperm.xlu0 %73, %v28
    %v75 = vpop.permute.xlu0 %74
    %vm76 = vcmp.eq.s32.totalorder %v75, %v27
    %vm77 = vmor %vm72, %vm76
    %78 = vset.pattern.permute.xlu0 10
    %79 = vperm.xlu0 %78, %v28
    %v80 = vpop.permute.xlu0 %79
    %vm81 = vcmp.eq.s32.totalorder %v80, %v27
    %vm82 = vmor %vm77, %vm81
    %83 = vset.pattern.permute.xlu0 11
    %84 = vperm.xlu0 %83, %v28
    %v85 = vpop.permute.xlu0 %84
    %vm86 = vcmp.eq.s32.totalorder %v85, %v27
    %vm87 = vmor %vm82, %vm86
    %88 = vset.pattern.permute.xlu0 12
    %89 = vperm.xlu0 %88, %v28
    %v90 = vpop.permute.xlu0 %89
    %vm91 = vcmp.eq.s32.totalorder %v90, %v27
    %vm92 = vmor %vm87, %vm91
    %93 = vset.pattern.permute.xlu0 13
    %94 = vperm.xlu0 %93, %v28
    %v95 = vpop.permute.xlu0 %94
    %vm96 = vcmp.eq.s32.totalorder %v95, %v27
    %vm97 = vmor %vm92, %vm96
    %98 = vset.pattern.permute.xlu0 14
    %99 = vperm.xlu0 %98, %v28
    %v100 = vpop.permute.xlu0 %99
    %vm101 = vcmp.eq.s32.totalorder %v100, %v27
    %vm102 = vmor %vm97, %vm101
    %103 = vset.pattern.permute.xlu0 15
    %104 = vperm.xlu0 %103, %v28
    %v105 = vpop.permute.xlu0 %104
    %vm106 = vcmp.eq.s32.totalorder %v105, %v27
    %vm107 = vmor %vm102, %vm106
    %108 = vset.pattern.permute.xlu0 16
    %109 = vperm.xlu0 %108, %v28
    %v110 = vpop.permute.xlu0 %109
    %vm111 = vcmp.eq.s32.totalorder %v110, %v27
    %vm112 = vmor %vm107, %vm111
    %113 = vset.pattern.permute.xlu0 17
    %114 = vperm.xlu0 %113, %v28
    %v115 = vpop.permute.xlu0 %114
    %vm116 = vcmp.eq.s32.totalorder %v115, %v27
    %vm117 = vmor %vm112, %vm116
    %118 = vset.pattern.permute.xlu0 18
    %119 = vperm.xlu0 %118, %v28
    %v120 = vpop.permute.xlu0 %119
    %vm121 = vcmp.eq.s32.totalorder %v120, %v27
    %vm122 = vmor %vm117, %vm121
    %123 = vset.pattern.permute.xlu0 19
    %124 = vperm.xlu0 %123, %v28
    %v125 = vpop.permute.xlu0 %124
    %vm126 = vcmp.eq.s32.totalorder %v125, %v27
    %vm127 = vmor %vm122, %vm126
    %128 = vset.pattern.permute.xlu0 20
    %129 = vperm.xlu0 %128, %v28
    %v130 = vpop.permute.xlu0 %129
    %vm131 = vcmp.eq.s32.totalorder %v130, %v27
    %vm132 = vmor %vm127, %vm131
    %133 = vset.pattern.permute.xlu0 21
    %134 = vperm.xlu0 %133, %v28
    %v135 = vpop.permute.xlu0 %134
    %vm136 = vcmp.eq.s32.totalorder %v135, %v27
    %vm137 = vmor %vm132, %vm136
    %138 = vset.pattern.permute.xlu0 22
    %139 = vperm.xlu0 %138, %v28
    %v140 = vpop.permute.xlu0 %139
    %vm141 = vcmp.eq.s32.totalorder %v140, %v27
    %vm142 = vmor %vm137, %vm141
    %143 = vset.pattern.permute.xlu0 23
    %144 = vperm.xlu0 %143, %v28
    %v145 = vpop.permute.xlu0 %144
    %vm146 = vcmp.eq.s32.totalorder %v145, %v27
    %vm147 = vmor %vm142, %vm146
    %148 = vset.pattern.permute.xlu0 24
    %149 = vperm.xlu0 %148, %v28
    %v150 = vpop.permute.xlu0 %149
    %vm151 = vcmp.eq.s32.totalorder %v150, %v27
    %vm152 = vmor %vm147, %vm151
    %153 = vset.pattern.permute.xlu0 25
    %154 = vperm.xlu0 %153, %v28
    %v155 = vpop.permute.xlu0 %154
    %vm156 = vcmp.eq.s32.totalorder %v155, %v27
    %vm157 = vmor %vm152, %vm156
    %158 = vset.pattern.permute.xlu0 26
    %159 = vperm.xlu0 %158, %v28
    %v160 = vpop.permute.xlu0 %159
    %vm161 = vcmp.eq.s32.totalorder %v160, %v27
    %vm162 = vmor %vm157, %vm161
    %163 = vset.pattern.permute.xlu0 27
    %164 = vperm.xlu0 %163, %v28
    %v165 = vpop.permute.xlu0 %164
    %vm166 = vcmp.eq.s32.totalorder %v165, %v27
    %vm167 = vmor %vm162, %vm166
    %168 = vset.pattern.permute.xlu0 28
    %169 = vperm.xlu0 %168, %v28
    %v170 = vpop.permute.xlu0 %169
    %vm171 = vcmp.eq.s32.totalorder %v170, %v27
    %vm172 = vmor %vm167, %vm171
    %173 = vset.pattern.permute.xlu0 29
    %174 = vperm.xlu0 %173, %v28
    %v175 = vpop.permute.xlu0 %174
    %vm176 = vcmp.eq.s32.totalorder %v175, %v27
    %vm177 = vmor %vm172, %vm176
    %178 = vset.pattern.permute.xlu0 30
    %179 = vperm.xlu0 %178, %v28
    %v180 = vpop.permute.xlu0 %179
    %vm181 = vcmp.eq.s32.totalorder %v180, %v27
    %vm182 = vmor %vm177, %vm181
    %183 = vset.pattern.permute.xlu0 31
    %184 = vperm.xlu0 %183, %v28
    %v185 = vpop.permute.xlu0 %184
    %vm186 = vcmp.eq.s32.totalorder %v185, %v27
    %vm187 = vmor %vm182, %vm186
    %vm188 = vmxor %vm187, 1
    %v189 = vsel %vm188, 1, 0
    %v190 = vcvt.s32.f32 %v189
    %191 = vst [vmem:[#allocation5] sm:$0x3] %v190
    // Predicated region
    $region10: #{tpu_custom_call.1} parent=1 // pred_check
      _
    $region11: #{tpu_custom_call.1} parent=1 // pred_check_branch
      %193 = sbr.rel (0) target = $region13
    $region12: #{tpu_custom_call.1} parent=1 // pred_region
      %195 = vsyncadd [#allocation4], 0
      %s197 = sshll.u32 [#allocation5], 4
      %s198 = int_to_ptr.vmem [resolvable:$true] %s197
      %s199 = sshll.u32 %s1, 4
      %s200 = int_to_ptr.hbm [resolvable:$true] %s199
      %202 = dma.vmem_to_hbm [thread:$0]  %s198, 32, %s200, [#allocation4]
    $region13: #{tpu_custom_call.1} parent=1 // pred_fallthru
      _
    // Predicated region
    $region14: #{tpu_custom_call.1} parent=1 // pred_check
      _
    $region15: #{tpu_custom_call.1} parent=1 // pred_check_branch
      %204 = sbr.rel (0) target = $region17
    $region16: #{tpu_custom_call.1} parent=1 // pred_region
      %206 = dma.done [#allocation4], 32
    $region17: #{tpu_custom_call.1} parent=1 // pred_fallthru
      _
    %207 = vsyncpa [#allocation3], 1
    %208 = vsyncpa [#allocation4], 1

</llo_original>
